<compile_context>
chip_gen: v5e
topology: v5e:2x2
jax: 0.10.0
libtpu: 0.0.40
codegen_flags: <defaults>
</compile_context>

<pallas_src>
import functools

import jax
import jax.numpy as jnp
from jax import lax
from jax.experimental import pallas as pl
from jax.experimental.pallas import tpu as pltpu


def _smoothing_kernel(w_ref, x_ref, o_ref, *, kernel_size: int):
    """Single-channel 1D conv (zero padded) over the lane axis of one row tile.

    w_ref : SMEM (K,)  f32   conv taps (scalar-prefetched)
    x_ref : VMEM (TB, Lp)    input rows (lane-padded with zeros past L)
    o_ref : VMEM (TB, Lp)    output rows
    """
    x = x_ref[...]
    _, Lp = x.shape
    pad = kernel_size // 2

    # Lane index, built once (cheap (1, Lp) compare per off-center tap).
    lane = lax.broadcasted_iota(jnp.int32, (1, Lp), dimension=1)

    # Center tap: no roll, no mask.
    acc = w_ref[pad] * x

    for k in range(kernel_size):          # static unroll over taps
        d = k - pad                       # out[i] += w[k] * x[i + d]
        if d == 0:
            continue
        # XLU roll (free slot in this mem-bound kernel); mask only kills the
        # circular wraparound at the tile edge, reproducing zero padding.
        rolled = pltpu.roll(x, shift=(-d) % Lp, axis=1)
        if d > 0:
            mask = (lane < Lp - d).astype(x.dtype)   # zero the last d lanes
        else:
            mask = (lane >= -d).astype(x.dtype)      # zero the first |d| lanes
        acc = acc + w_ref[k] * (mask * rolled)

    o_ref[...] = acc.astype(o_ref.dtype)


def _reference(h_values, weights):
    """Pure-JAX reference: zero-padded 1D conv with the same taps."""
    K = weights.shape[0]
    pad = K // 2
    xpad = jnp.pad(h_values, ((0, 0), (pad, pad)))
    L = h_values.shape[1]
    out = jnp.zeros_like(h_values)
    for k in range(K):
        out = out + weights[k] * xpad[:, k:k + L]
    return out


def _round_up(x, m):
    return ((x + m - 1) // m) * m


def learnable_smoothing_layer(h_values, weights, *, block_rows=512,
                              force_pallas=False):
    """Pallas equivalent of LearnableSmoothingLayer.forward.

    h_values: (B, L) or (B, 1, L)
    weights : (K,) conv taps (PyTorch weight is (1, 1, K); squeezed here)
    returns : (B, L)  (torch squeezes the channel dim back out)
    """
    if h_values.ndim == 3:
        assert h_values.shape[1] == 1
        h_values = h_values[:, 0, :]
    assert h_values.ndim == 2

    B, L = h_values.shape
    K = int(weights.shape[0])
    assert K % 2 == 1, "odd kernel sizes only (module default K=3)"
    assert L >= K

    # Small-input fast path: pallas launch/step overhead dominates tiny tensors.
    if not force_pallas and B * L < 64 * 1024:
        return _reference(h_values, weights).astype(h_values.dtype)

    # Lane-dense output: pad L to a multiple of 128.  Zero padding past L-1 is
    # exactly the conv's own zero-padding semantics, so we just slice after.
    Lp = _round_up(L, 128)
    x = h_values
    if Lp != L:
        x = jnp.pad(x, ((0, 0), (0, Lp - L)))

    # Row-tile size: <= ~4 MiB per block so 2x-buffered in+out (+ temps) fits
    # comfortably on every generation (v7x has only 64 MiB VMEM).
    bytes_per_row = Lp * jnp.dtype(x.dtype).itemsize
    max_block_bytes = 4 * 1024 * 1024
    rows_budget = max(8, (max_block_bytes // bytes_per_row) // 8 * 8)
    tb = min(block_rows, _round_up(B, 8), rows_budget)
    tb = max(8, (tb // 8) * 8)

    kernel = functools.partial(_smoothing_kernel, kernel_size=K)

    out = pl.pallas_call(
        kernel,
        out_shape=jax.ShapeDtypeStruct((B, Lp), x.dtype),
        grid_spec=pltpu.PrefetchScalarGridSpec(
            num_scalar_prefetch=1,                      # conv taps -> SMEM
            grid=(pl.cdiv(B, tb),),
            in_specs=[pl.BlockSpec((tb, Lp), lambda i, w: (i, 0))],
            out_specs=pl.BlockSpec((tb, Lp), lambda i, w: (i, 0)),
        ),
        compiler_params=pltpu.CompilerParams(
            dimension_semantics=("parallel",),          # 2 TCs on v7x
            vmem_limit_bytes=48 * 1024 * 1024,          # v5e default is 16 MiB
        ),
    )(weights.astype(jnp.float32), x)

    if Lp != L:
        out = out[:, :L]
    return out


if __name__ == "__main__":
    kernel_size = 3
    key = jax.random.PRNGKey(0)
    k1, k2 = jax.random.split(key)

    # nn.init.constant_(weight, 1/kernel_size); torch weight (1,1,K) -> (K,)
    weights = jnp.full((kernel_size,), 1.0 / kernel_size, dtype=jnp.float32)

    # Case 1: small (B, L) input (module's 2-D path).  Force the Pallas path so
    # the TPU kernel is exercised even below the fast-path threshold.
    B, L = 8, 128
    h = jax.random.normal(k1, (B, L), dtype=jnp.float32)
    out = jax.block_until_ready(
        learnable_smoothing_layer(h, weights, force_pallas=True))
    ref = _reference(h, weights)
    assert out.shape == (B, L)
    assert jnp.allclose(out, ref, atol=1e-5, rtol=1e-5), "case 1 mismatch"

    # Case 2: (B, 1, L) input path, ragged L (lane-padded to 256) and a
    # multi-block row grid (block_rows=16 -> 5 grid steps incl. overhang).
    B2, L2 = 72, 200
    h2 = jax.random.normal(k2, (B2, 1, L2), dtype=jnp.float32)
    out2 = jax.block_until_ready(
        learnable_smoothing_layer(h2, weights, block_rows=16, force_pallas=True))
    ref2 = _reference(h2[:, 0, :], weights)
    assert out2.shape == (B2, L2)
    assert jnp.allclose(out2, ref2, atol=1e-5, rtol=1e-5), "case 2 mismatch"

    # Case 3: tiny-input fast path (pure JAX) gives the same answer.
    out3 = jax.block_until_ready(learnable_smoothing_layer(h, weights))
    assert jnp.allclose(out3, ref, atol=1e-5, rtol=1e-5), "case 3 mismatch"

    print("KERNEL_OK")
</pallas_src>

<mosaic_0001>
module attributes {stable_mosaic.version = 11 : i64} {
  func.func @_smoothing_kernel(%arg0: i32, %arg1: memref<3xf32, #tpu.memory_space<smem>>, %arg2: memref<8x128xf32, #tpu.memory_space<vmem>>, %arg3: memref<8x128xf32, #tpu.memory_space<vmem>>) attributes {dimension_semantics = [#tpu.dimension_semantics<parallel>], iteration_bounds = array<i64: 1>, scalar_prefetch = 1 : i64, scratch_operands = 0 : i64, tpu.core_type = #tpu.core_type<tc>, window_params = [{transform_indices = @transform_0, window_bounds = array<i64: 8, 128>}, {transform_indices = @transform_1, window_bounds = array<i64: 8, 128>}]} {
    %c0 = arith.constant 0 : index
    %c0_0 = arith.constant 0 : index
    %0 = vector.load %arg2[%c0, %c0_0] : memref<8x128xf32, #tpu.memory_space<vmem>>, vector<8x128xf32>
    %1 = tpu.iota {dimensions = array<i32: 1>} : vector<1x128xi32>
    %c1 = arith.constant 1 : index
    %2 = memref.load %arg1[%c1] : memref<3xf32, #tpu.memory_space<smem>>
    %3 = vector.broadcast %2 : f32 to vector<8x128xf32>
    %4 = arith.mulf %3, %0 : vector<8x128xf32>
    %c1_i32 = arith.constant 1 : i32
    %5 = tpu.dynamic_rotate %0 by %c1_i32 dim 1 : vector<8x128xf32>, i32 -> vector<8x128xf32>
    %c1_i32_1 = arith.constant 1 : i32
    %6 = vector.broadcast %c1_i32_1 : i32 to vector<1x128xi32>
    %7 = arith.cmpi sge, %1, %6 : vector<1x128xi32>
    %8 = arith.extui %7 : vector<1x128xi1> to vector<1x128xi32>
    %9 = arith.sitofp %8 : vector<1x128xi32> to vector<1x128xf32>
    %c0_2 = arith.constant 0 : index
    %10 = memref.load %arg1[%c0_2] : memref<3xf32, #tpu.memory_space<smem>>
    %11 = vector.broadcast %9 : vector<1x128xf32> to vector<8x128xf32>
    %12 = arith.mulf %11, %5 : vector<8x128xf32>
    %13 = vector.broadcast %10 : f32 to vector<8x128xf32>
    %14 = arith.mulf %13, %12 : vector<8x128xf32>
    %15 = arith.addf %4, %14 : vector<8x128xf32>
    %c127_i32 = arith.constant 127 : i32
    %16 = tpu.dynamic_rotate %0 by %c127_i32 dim 1 : vector<8x128xf32>, i32 -> vector<8x128xf32>
    %c127_i32_3 = arith.constant 127 : i32
    %17 = vector.broadcast %c127_i32_3 : i32 to vector<1x128xi32>
    %18 = arith.cmpi slt, %1, %17 : vector<1x128xi32>
    %19 = arith.extui %18 : vector<1x128xi1> to vector<1x128xi32>
    %20 = arith.sitofp %19 : vector<1x128xi32> to vector<1x128xf32>
    %c2 = arith.constant 2 : index
    %21 = memref.load %arg1[%c2] : memref<3xf32, #tpu.memory_space<smem>>
    %22 = vector.broadcast %20 : vector<1x128xf32> to vector<8x128xf32>
    %23 = arith.mulf %22, %16 : vector<8x128xf32>
    %24 = vector.broadcast %21 : f32 to vector<8x128xf32>
    %25 = arith.mulf %24, %23 : vector<8x128xf32>
    %26 = arith.addf %15, %25 : vector<8x128xf32>
    %c0_4 = arith.constant 0 : index
    %c0_5 = arith.constant 0 : index
    %27 = vector.load %arg3[%c0_4, %c0_5] : memref<8x128xf32, #tpu.memory_space<vmem>>, vector<8x128xf32>
    tpu.vector_store %arg3[%c0_4, %c0_5], %26 {strides = array<i32>} : memref<8x128xf32, #tpu.memory_space<vmem>>, vector<8x128xf32>,
    return
  }
  func.func @transform_0(%arg0: i32, %arg1: memref<3xf32, #tpu.memory_space<smem>>) -> (i32, i32) {
    %c0_i32 = arith.constant 0 : i32
    %c0_i32_0 = arith.constant 0 : i32
    return %arg0, %c0_i32 : i32, i32
  }
  func.func @transform_1(%arg0: i32, %arg1: memref<3xf32, #tpu.memory_space<smem>>) -> (i32, i32) {
    %c0_i32 = arith.constant 0 : i32
    %c0_i32_0 = arith.constant 0 : i32
    return %arg0, %c0_i32 : i32, i32
  }
}

</mosaic_0001>

<llo_original>
// kernel: tpu_custom_call.1
$region0: #{tpu_custom_call.1}
  #allocation0 [shape = 'u32[]', space=smem, size = 0x4, offset = 0x4, fixed_abs, tag = 'smem constant byte address 0x4 - core index']
  #allocation1 [shape = 'u32[72,128]{1,0:T(1,128)}', space=vmem, size = 0x9000, scoped, tag = 'internal scratch']
  #allocation2 [shape = 's32[1]{0}', space=sflag, size = 0x4, scoped, tag = 'scoped memory for tpu_custom_call.1']
  #allocation3 [shape = 'u8[512]{0}', space=smem, size = 0x200, scoped, tag = 'prefetched SMEM operand 0']
  %s0 = inlined_call_operand.hbm [shape: f32[3], index: 0, kind: input, shape index: {}]
  %s1 = inlined_call_operand.hbm [shape: f32[8,128], index: 1, kind: input, shape index: {}]
  %s2 = inlined_call_operand.hbm [shape: f32[8,128], index: 2, kind: output, shape index: {}]
  %s3 = sld [smem:[#allocation0]]
  $region18: #{tpu_custom_call.1} parent=0
    _
  %s5 = ssub.s32 1, %s3
  %s6 = scalar_select 0, %s5, %s3
  %s8 = sshll.u32 %s0, 4
  %s9 = int_to_ptr.hbm [resolvable:$true] %s8
  %11 = dma.hbm_to_smem %s9, 16, [#allocation3], [#allocation2]
  %13 = dma.done [#allocation2], 16
  %14 = sfence
  $region1: #{tpu_custom_call.1} parent=0
    #allocation4 [shape = 'u8[4096]{0}', space=vmem, size = 0x1000, scoped, tag = 'input window, operand 1, single buffered']
    #allocation5 [shape = 's32[1]{0}', space=sflag, size = 0x4, scoped, tag = 'scoped memory for tpu_custom_call.1']
    #allocation6 [shape = 's32[1]{0}', space=sflag, size = 0x4, scoped, tag = 'scoped memory for tpu_custom_call.1']
    #allocation7 [shape = 'u8[4096]{0}', space=vmem, size = 0x1000, scoped, tag = 'output window, operand 0, single buffered']
    %15 = vsyncpa [#allocation5], 0
    %16 = vsyncpa [#allocation6], 0
    // Predicated region
    $region2: #{tpu_custom_call.1} parent=1 // pred_check
      _
    $region3: #{tpu_custom_call.1} parent=1 // pred_check_branch
      %18 = sbr.rel (0) target = $region5
    $region4: #{tpu_custom_call.1} parent=1 // pred_region
      %20 = vsyncadd [#allocation5], 0
      %s22 = sshll.u32 %s1, 4
      %s23 = int_to_ptr.hbm [resolvable:$true] %s22
      %s24 = sshll.u32 [#allocation4], 4
      %s25 = int_to_ptr.vmem [resolvable:$true] %s24
      %27 = dma.hbm_to_vmem [thread:$0]  %s23, 128, %s25, [#allocation5]
    $region5: #{tpu_custom_call.1} parent=1 // pred_fallthru
      _
    // Predicated region
    $region6: #{tpu_custom_call.1} parent=1 // pred_check
      _
    $region7: #{tpu_custom_call.1} parent=1 // pred_check_branch
      %29 = sbr.rel (0) target = $region9
    $region8: #{tpu_custom_call.1} parent=1 // pred_region
      %31 = dma.done [#allocation5], 128
    $region9: #{tpu_custom_call.1} parent=1 // pred_fallthru
      _
    %v32 = vld [vmem:[#allocation4] sm:$0xff]
    %v33 = vlaneseq
    %v34 = vand.u32 %v33, 127
    %s35 = sld [smem:[#allocation3 + $0x1]]
    %v36 = vstv %s35
    %v37 = vmul.f32 %v36, %v32
    %38 = vrot.lane.b32.xlu0 %v32, 1
    %v39 = vpop.permute.xlu0 %38
    %vm40 = vcmp.ge.s32.totalorder %v34, 1
    %v41 = vsel %vm40, 1, 0
    %v42 = vcvt.s32.f32 %v41
    %s43 = sld [smem:[#allocation3]]
    %v44 = vmul.f32 %v42, %v39
    %v45 = vstv %s43
    %v46 = vmul.f32 %v45, %v44
    %v47 = vadd.f32 %v37, %v46
    %48 = vrot.lane.b32.xlu0 %v32, 127
    %v49 = vpop.permute.xlu0 %48
    %vm50 = vcmp.lt.s32.totalorder %v34, 127
    %v51 = vsel %vm50, 1, 0
    %v52 = vcvt.s32.f32 %v51
    %s53 = sld [smem:[#allocation3 + $0x2]]
    %v54 = vmul.f32 %v52, %v49
    %v55 = vstv %s53
    %v56 = vmul.f32 %v55, %v54
    %v57 = vadd.f32 %v47, %v56
    %58 = vst [vmem:[#allocation7] sm:$0xff] %v57
    // Predicated region
    $region10: #{tpu_custom_call.1} parent=1 // pred_check
      _
    $region11: #{tpu_custom_call.1} parent=1 // pred_check_branch
      %60 = sbr.rel (0) target = $region13
    $region12: #{tpu_custom_call.1} parent=1 // pred_region
      %62 = vsyncadd [#allocation6], 0
      %s64 = sshll.u32 [#allocation7], 4
      %s65 = int_to_ptr.vmem [resolvable:$true] %s64
      %s66 = sshll.u32 %s2, 4
      %s67 = int_to_ptr.hbm [resolvable:$true] %s66
      %69 = dma.vmem_to_hbm [thread:$0]  %s65, 128, %s67, [#allocation6]
    $region13: #{tpu_custom_call.1} parent=1 // pred_fallthru
      _
    // Predicated region
    $region14: #{tpu_custom_call.1} parent=1 // pred_check
      _
    $region15: #{tpu_custom_call.1} parent=1 // pred_check_branch
      %71 = sbr.rel (0) target = $region17
    $region16: #{tpu_custom_call.1} parent=1 // pred_region
      %73 = dma.done [#allocation6], 128
    $region17: #{tpu_custom_call.1} parent=1 // pred_fallthru
      _
    %74 = vsyncpa [#allocation5], 1
    %75 = vsyncpa [#allocation6], 1

</llo_original>
